<compile_context>
chip_gen: v6e
topology: v6e:2x2x1
jax: 0.10.0
libtpu: 0.0.40
codegen_flags: <defaults>
</compile_context>

<pallas_src>
import jax
import jax.numpy as jnp
from jax.experimental import pallas as pl
from jax.experimental.pallas import tpu as pltpu

PATCH = 41          # self.patch_size
PAD = PATCH // 2    # self.padding == 20
DEPTH = 3           # channel extent of the MaxPool3d window (no channel pad)
HALO = 24           # +inf rows above/below each strip: >= PAD and 8-aligned
LANE = 128
SUB = 8


def _round_up(x, m):
    return ((x + m - 1) // m) * m


def _sliding_min_centered(x, axis, window):
    """out[i] = min(x[i - window//2 : i + window//2 + 1]) along `axis`.

    Fixed-width log-doubling sliding minimum built from pltpu.roll (XLU) +
    jnp.minimum (VPU); no shrinking / misaligned slices are materialized.
    Positions closer than `window` to either end read wrapped-around values
    and are garbage; callers keep >= window//2 +inf border elements on both
    sides of the region they extract, so those positions are never used.
    Each power-of-two partial minimum is folded into `result` as soon as it is
    built, keeping live ranges short.
    """
    n = x.shape[axis]
    result = None
    offset = -(window // 2)   # window-start offset of the next uncovered element
    m = x                     # left-aligned sliding min of width `width`
    width = 1
    remaining = window
    while True:
        if remaining & width:
            shift = (-offset) % n
            contrib = pltpu.roll(m, shift, axis=axis) if shift else m
            result = contrib if result is None else jnp.minimum(result, contrib)
            offset += width
            remaining -= width
        if remaining == 0:
            break
        m = jnp.minimum(m, pltpu.roll(m, n - width, axis=axis))
        width *= 2
    return result


def dark_channel_prior_loss(rgb, *, tile_h=256):
    """rgb: (B, C, H, W), C >= 3.  Returns (loss, dcp) like the nn.Module."""
    B, C, H, W = rgb.shape
    assert C >= DEPTH, "need at least 3 channels (RGB)"
    n_oc = C - DEPTH + 1                                  # == 1 for RGB

    work_dtype = rgb.dtype if rgb.dtype in (jnp.bfloat16, jnp.float32) else jnp.float32
    rgb = rgb.astype(work_dtype)

    # --- tiling / padded geometry -------------------------------------------
    tile_h = max(SUB, _round_up(min(tile_h, _round_up(H, SUB)), SUB))
    nh = pl.cdiv(H, tile_h)
    h_round = nh * tile_h                                 # H rounded to full tiles
    sh = tile_h + 2 * HALO                                # strip height incl. halo
    w_pad = _round_up(W, LANE)                            # lane-dense output width
    # interior starts at lane offset 128; a right +inf border is only needed if
    # the round-up slack does not already provide PAD columns of padding
    w_total = LANE + w_pad + (0 if (w_pad - W) >= PAD else LANE)
    h_total = h_round + 2 * HALO

    # Pre-pad with +inf (== the reference's -inf padding for max(-rgb)) so each
    # strip is a plain rectangular slice and every buffer stays (8,128)-aligned.
    # TODO(synk): fill the borders in-kernel instead to avoid this extra HBM
    # pass over the input at very large resolutions.
    padded = jnp.full((B, C, h_total, w_total), jnp.inf, work_dtype)
    padded = padded.at[:, :, HALO:HALO + H, LANE:LANE + W].set(rgb)

    def kernel(rgb_hbm, dcp_ref, sum_ref, strip_buf, copy_sem):
        b = pl.program_id(0)
        h = pl.program_id(1)
        n_h = pl.num_programs(1)
        slot = h % 2

        def strip_copy(step_h, buf_slot):
            row0 = pl.multiple_of(step_h * tile_h, SUB)
            return pltpu.make_async_copy(
                rgb_hbm.at[b, :, pl.ds(row0, sh), :],
                strip_buf.at[buf_slot],
                copy_sem.at[buf_slot])

        # Prime the double buffer at the first strip of each batch element and
        # keep one strip of look-ahead in flight (issue h+1 before blocking on h).
        @pl.when(h == 0)
        def _():
            strip_copy(h, slot).start()

        @pl.when(h + 1 < n_h)
        def _():
            strip_copy(h + 1, 1 - slot).start()

        strip_copy(h, slot).wait()
        cur = strip_buf.at[slot]                           # (C, sh, w_total) view

        # Validity masks for the H/W round-up padding (hoisted out of the
        # channel loop); padded rows/cols must not leak +inf into the loss.
        row_ids = jax.lax.broadcasted_iota(jnp.int32, (tile_h, w_pad), 0)
        col_ids = jax.lax.broadcasted_iota(jnp.int32, (tile_h, w_pad), 1)
        valid_rows = H - h * tile_h                        # may exceed tile_h
        valid = (row_ids < valid_rows) & (col_ids < W)

        total = jnp.zeros((1, 1), jnp.float32)
        for oc in range(n_oc):
            # min over the 3-deep channel window of the MaxPool3d
            cmin = cur[oc]
            for dc in range(1, DEPTH):
                cmin = jnp.minimum(cmin, cur[oc + dc])

            # 41-tap sliding min along H (sublanes) then W (lanes); both output
            # slices land on (8,128) boundaries.
            hmin = _sliding_min_centered(cmin, axis=0, window=PATCH)
            hmin = hmin[HALO:HALO + tile_h, :]
            wmin = _sliding_min_centered(hmin, axis=1, window=PATCH)

            # dcp = |maxpool(-rgb)| = |min over window of rgb|
            dcp = jnp.abs(wmin[:, LANE:LANE + w_pad])
            dcp_ref[0, oc] = dcp.astype(dcp_ref.dtype)

            masked = jnp.where(valid, dcp.astype(jnp.float32), 0.0)
            total = total + jnp.sum(
                jnp.sum(masked, axis=1, keepdims=True), axis=0, keepdims=True)

        # one aligned, unmasked full-vreg store of this strip's partial sum
        sum_ref[0, 0] = jnp.broadcast_to(total, (SUB, LANE))

    # ~25% headroom below physical VMEM (64 MiB/TC on v7x, 128 MiB on v5e/v6e);
    # with tile_h=256 at 1080p the working set is ~35 MiB.
    try:
        vmem_cap = int(getattr(pltpu.get_tpu_info(), "vmem_capacity_bytes",
                               64 * 1024 * 1024))
    except Exception:
        vmem_cap = 64 * 1024 * 1024
    vmem_limit = (vmem_cap * 3) // 4

    dcp_full, sums = pl.pallas_call(
        kernel,
        grid=(B, nh),
        in_specs=[pl.BlockSpec(memory_space=pl.ANY)],      # stays in HBM; manual DMA
        out_specs=(
            pl.BlockSpec((1, n_oc, tile_h, w_pad), lambda b, h: (b, 0, h, 0)),
            pl.BlockSpec((1, 1, SUB, LANE), lambda b, h: (b, h, 0, 0)),
        ),
        out_shape=(
            jax.ShapeDtypeStruct((B, n_oc, h_round, w_pad), work_dtype),
            jax.ShapeDtypeStruct((B, nh, SUB, LANE), jnp.float32),
        ),
        scratch_shapes=[
            pltpu.VMEM((2, C, sh, w_total), work_dtype),   # strip double buffer
            pltpu.SemaphoreType.DMA((2,)),
        ],
        # Batch axis is megacore-shardable; the h axis carries the manual
        # prefetch chain and must stay sequential ("arbitrary").
        # TODO(synk): for B == 1 on v7x, shard the h axis across the two
        # TensorCores with pl.core_map instead of relying on the batch axis.
        compiler_params=pltpu.CompilerParams(
            dimension_semantics=("parallel", "arbitrary"),
            vmem_limit_bytes=vmem_limit,
        ),
    )(padded)

    dcp = dcp_full[:, :, :H, :W]
    loss = jnp.sum(sums[:, :, 0, 0]) / (B * n_oc * H * W)
    return loss, dcp


def _reference(rgb):
    """Pure-JAX reference reproducing the PyTorch forward."""
    neg = -rgb
    pooled = jax.lax.reduce_window(
        neg, -jnp.inf, jax.lax.max,
        window_dimensions=(1, DEPTH, PATCH, PATCH),
        window_strides=(1, 1, 1, 1),
        padding=((0, 0), (0, 0), (PAD, PAD), (PAD, PAD)))
    dcp = jnp.abs(pooled)
    return jnp.mean(dcp), dcp


if __name__ == "__main__":
    key = jax.random.PRNGKey(0)
    # Small but deliberately awkward shapes: H=44 is not a tile multiple
    # (exercises the row mask / round-up padding) and W=200 is not lane-dense
    # (exercises the wrapper's 128-padding + column mask).
    B, C, H, W = 2, 3, 44, 200
    rgb = jax.random.uniform(key, (B, C, H, W), dtype=jnp.float32)

    ref_loss, ref_dcp = _reference(rgb)

    for tile in (16, 256):      # multi-strip (NH=3) and single-strip paths
        loss, dcp = dark_channel_prior_loss(rgb, tile_h=tile)
        jax.block_until_ready((loss, dcp))
        assert dcp.shape == ref_dcp.shape == (B, C - DEPTH + 1, H, W)
        assert jnp.allclose(dcp, ref_dcp, atol=1e-6), f"dcp mismatch (tile_h={tile})"
        assert jnp.allclose(loss, ref_loss, atol=1e-6), f"loss mismatch (tile_h={tile})"

    print("KERNEL_OK")
</pallas_src>

<mosaic_0001>
module attributes {stable_mosaic.version = 11 : i64} {
  func.func @kernel(%arg0: i32, %arg1: i32, %arg2: memref<2x3x96x384xf32, #tpu.memory_space<any>>, %arg3: memref<1x1x16x256xf32, #tpu.memory_space<vmem>>, %arg4: memref<1x1x8x128xf32, #tpu.memory_space<vmem>>, %arg5: memref<2x3x64x384xf32, #tpu.memory_space<vmem>>, %arg6: memref<2x!tpu.dma_semaphore, #tpu.memory_space<semaphore_mem>>) attributes {dimension_semantics = [#tpu.dimension_semantics<parallel>, #tpu.dimension_semantics<arbitrary>], iteration_bounds = array<i64: 2, 3>, scalar_prefetch = 0 : i64, scratch_operands = 2 : i64, tpu.core_type = #tpu.core_type<tc>, window_params = [{}, {transform_indices = @transform_1, window_bounds = array<i64: 1, 1, 16, 256>}, {transform_indices = @transform_2, window_bounds = array<i64: 1, 1, 8, 128>}]} {
    %c2_i32 = arith.constant 2 : i32
    %c0_i32 = arith.constant 0 : i32
    %0 = arith.cmpi eq, %c2_i32, %c0_i32 : i32
    %c1_i32 = arith.constant 1 : i32
    %1 = arith.select %0, %c1_i32, %c2_i32 : i32
    %2 = arith.remsi %arg1, %1 : i32
    %c0_i32_0 = arith.constant 0 : i32
    %3 = arith.cmpi ne, %2, %c0_i32_0 : i32
    %c0_i32_1 = arith.constant 0 : i32
    %4 = arith.cmpi slt, %2, %c0_i32_1 : i32
    %c0_i32_2 = arith.constant 0 : i32
    %5 = arith.cmpi slt, %1, %c0_i32_2 : i32
    %6 = arith.xori %4, %5 : i1
    %7 = arith.andi %6, %3 : i1
    %8 = arith.addi %2, %1 : i32
    %9 = arith.select %7, %8, %2 : i32
    %c0_i32_3 = arith.constant 0 : i32
    %10 = arith.cmpi eq, %arg1, %c0_i32_3 : i32
    %11 = arith.extui %10 : i1 to i32
    %c0_i32_4 = arith.constant 0 : i32
    %12 = arith.cmpi ne, %11, %c0_i32_4 : i32
    scf.if %12 {
      %c16_i32_42 = arith.constant 16 : i32
      %97 = arith.muli %arg1, %c16_i32_42 : i32
      %98 = tpu.assume_multiple %97, 8 : i32
      %c0_i32_43 = arith.constant 0 : i32
      %c0_i32_44 = arith.constant 0 : i32
      %99 = tpu.memref_slice %arg2[%arg0, %c0_i32_43, %98, %c0_i32_44] : memref<2x3x96x384xf32, #tpu.memory_space<any>> -> memref<1x3x64x384xf32, #tpu.memory_space<any>>
      %100 = tpu.memref_squeeze %99 : memref<1x3x64x384xf32, #tpu.memory_space<any>> -> memref<3x64x384xf32, #tpu.memory_space<any>>
      %c0_i32_45 = arith.constant 0 : i32
      %c0_i32_46 = arith.constant 0 : i32
      %c0_i32_47 = arith.constant 0 : i32
      %101 = tpu.memref_slice %arg5[%9, %c0_i32_45, %c0_i32_46, %c0_i32_47] : memref<2x3x64x384xf32, #tpu.memory_space<vmem>> -> memref<1x3x64x384xf32, #tpu.memory_space<vmem>>
      %102 = tpu.memref_squeeze %101 : memref<1x3x64x384xf32, #tpu.memory_space<vmem>> -> memref<3x64x384xf32, #tpu.memory_space<vmem>>
      %103 = tpu.memref_slice %arg6[%9] : memref<2x!tpu.dma_semaphore, #tpu.memory_space<semaphore_mem>> -> memref<1x!tpu.dma_semaphore, #tpu.memory_space<semaphore_mem>>
      %104 = tpu.memref_squeeze %103 : memref<1x!tpu.dma_semaphore, #tpu.memory_space<semaphore_mem>> -> memref<!tpu.dma_semaphore, #tpu.memory_space<semaphore_mem>>
      tpu.enqueue_dma source(%100 : memref<3x64x384xf32, #tpu.memory_space<any>>) target(%102 : memref<3x64x384xf32, #tpu.memory_space<vmem>>) target_semaphore(%104 : memref<!tpu.dma_semaphore, #tpu.memory_space<semaphore_mem>>)
    } else {
    }
    %c1_i32_5 = arith.constant 1 : i32
    %13 = arith.addi %arg1, %c1_i32_5 : i32
    %c3_i32 = arith.constant 3 : i32
    %14 = arith.cmpi slt, %13, %c3_i32 : i32
    %15 = arith.extui %14 : i1 to i32
    %c0_i32_6 = arith.constant 0 : i32
    %16 = arith.cmpi ne, %15, %c0_i32_6 : i32
    scf.if %16 {
      %c1_i32_42 = arith.constant 1 : i32
      %97 = arith.addi %arg1, %c1_i32_42 : i32
      %c1_i32_43 = arith.constant 1 : i32
      %98 = arith.subi %c1_i32_43, %9 : i32
      %c16_i32_44 = arith.constant 16 : i32
      %99 = arith.muli %97, %c16_i32_44 : i32
      %100 = tpu.assume_multiple %99, 8 : i32
      %c0_i32_45 = arith.constant 0 : i32
      %c0_i32_46 = arith.constant 0 : i32
      %101 = tpu.memref_slice %arg2[%arg0, %c0_i32_45, %100, %c0_i32_46] : memref<2x3x96x384xf32, #tpu.memory_space<any>> -> memref<1x3x64x384xf32, #tpu.memory_space<any>>
      %102 = tpu.memref_squeeze %101 : memref<1x3x64x384xf32, #tpu.memory_space<any>> -> memref<3x64x384xf32, #tpu.memory_space<any>>
      %c0_i32_47 = arith.constant 0 : i32
      %c0_i32_48 = arith.constant 0 : i32
      %c0_i32_49 = arith.constant 0 : i32
      %103 = tpu.memref_slice %arg5[%98, %c0_i32_47, %c0_i32_48, %c0_i32_49] : memref<2x3x64x384xf32, #tpu.memory_space<vmem>> -> memref<1x3x64x384xf32, #tpu.memory_space<vmem>>
      %104 = tpu.memref_squeeze %103 : memref<1x3x64x384xf32, #tpu.memory_space<vmem>> -> memref<3x64x384xf32, #tpu.memory_space<vmem>>
      %105 = tpu.memref_slice %arg6[%98] : memref<2x!tpu.dma_semaphore, #tpu.memory_space<semaphore_mem>> -> memref<1x!tpu.dma_semaphore, #tpu.memory_space<semaphore_mem>>
      %106 = tpu.memref_squeeze %105 : memref<1x!tpu.dma_semaphore, #tpu.memory_space<semaphore_mem>> -> memref<!tpu.dma_semaphore, #tpu.memory_space<semaphore_mem>>
      tpu.enqueue_dma source(%102 : memref<3x64x384xf32, #tpu.memory_space<any>>) target(%104 : memref<3x64x384xf32, #tpu.memory_space<vmem>>) target_semaphore(%106 : memref<!tpu.dma_semaphore, #tpu.memory_space<semaphore_mem>>)
    } else {
    }
    %c16_i32 = arith.constant 16 : i32
    %17 = arith.muli %arg1, %c16_i32 : i32
    %18 = tpu.assume_multiple %17, 8 : i32
    %c0_i32_7 = arith.constant 0 : i32
    %c0_i32_8 = arith.constant 0 : i32
    %19 = tpu.memref_slice %arg2[%arg0, %c0_i32_7, %18, %c0_i32_8] : memref<2x3x96x384xf32, #tpu.memory_space<any>> -> memref<1x3x64x384xf32, #tpu.memory_space<any>>
    %20 = tpu.memref_squeeze %19 : memref<1x3x64x384xf32, #tpu.memory_space<any>> -> memref<3x64x384xf32, #tpu.memory_space<any>>
    %c0_i32_9 = arith.constant 0 : i32
    %c0_i32_10 = arith.constant 0 : i32
    %c0_i32_11 = arith.constant 0 : i32
    %21 = tpu.memref_slice %arg5[%9, %c0_i32_9, %c0_i32_10, %c0_i32_11] : memref<2x3x64x384xf32, #tpu.memory_space<vmem>> -> memref<1x3x64x384xf32, #tpu.memory_space<vmem>>
    %22 = tpu.memref_squeeze %21 : memref<1x3x64x384xf32, #tpu.memory_space<vmem>> -> memref<3x64x384xf32, #tpu.memory_space<vmem>>
    %23 = tpu.memref_slice %arg6[%9] : memref<2x!tpu.dma_semaphore, #tpu.memory_space<semaphore_mem>> -> memref<1x!tpu.dma_semaphore, #tpu.memory_space<semaphore_mem>>
    %24 = tpu.memref_squeeze %23 : memref<1x!tpu.dma_semaphore, #tpu.memory_space<semaphore_mem>> -> memref<!tpu.dma_semaphore, #tpu.memory_space<semaphore_mem>>
    tpu.wait_dma2 semaphore(%24 : memref<!tpu.dma_semaphore, #tpu.memory_space<semaphore_mem>>) src(%20 : memref<3x64x384xf32, #tpu.memory_space<any>>) dst(%22 : memref<3x64x384xf32, #tpu.memory_space<vmem>>)
    %25 = tpu.iota {dimensions = array<i32: 0>} : vector<16x256xi32>
    %26 = tpu.iota {dimensions = array<i32: 1>} : vector<16x256xi32>
    %c16_i32_12 = arith.constant 16 : i32
    %27 = arith.muli %arg1, %c16_i32_12 : i32
    %c44_i32 = arith.constant 44 : i32
    %28 = arith.subi %c44_i32, %27 : i32
    %29 = vector.broadcast %28 : i32 to vector<16x256xi32>
    %30 = arith.cmpi slt, %25, %29 : vector<16x256xi32>
    %c200_i32 = arith.constant 200 : i32
    %31 = vector.broadcast %c200_i32 : i32 to vector<16x256xi32>
    %32 = arith.cmpi slt, %26, %31 : vector<16x256xi32>
    %33 = arith.andi %30, %32 : vector<16x256xi1>
    %cst = arith.constant 0.000000e+00 : f32
    %34 = vector.broadcast %cst : f32 to vector<1x1xf32>
    %c0_i32_13 = arith.constant 0 : i32
    %c0_i32_14 = arith.constant 0 : i32
    %c0_i32_15 = arith.constant 0 : i32
    %35 = tpu.memref_slice %arg5[%9, %c0_i32_13, %c0_i32_14, %c0_i32_15] : memref<2x3x64x384xf32, #tpu.memory_space<vmem>> -> memref<1x3x64x384xf32, #tpu.memory_space<vmem>>
    %36 = tpu.memref_squeeze %35 : memref<1x3x64x384xf32, #tpu.memory_space<vmem>> -> memref<3x64x384xf32, #tpu.memory_space<vmem>>
    %c0 = arith.constant 0 : index
    %c0_16 = arith.constant 0 : index
    %c0_17 = arith.constant 0 : index
    %37 = vector.load %36[%c0, %c0_16, %c0_17] : memref<3x64x384xf32, #tpu.memory_space<vmem>>, vector<1x64x384xf32>
    %38 = vector.shape_cast %37 : vector<1x64x384xf32> to vector<64x384xf32>
    %c0_i32_18 = arith.constant 0 : i32
    %c0_i32_19 = arith.constant 0 : i32
    %c0_i32_20 = arith.constant 0 : i32
    %39 = tpu.memref_slice %arg5[%9, %c0_i32_18, %c0_i32_19, %c0_i32_20] : memref<2x3x64x384xf32, #tpu.memory_space<vmem>> -> memref<1x3x64x384xf32, #tpu.memory_space<vmem>>
    %40 = tpu.memref_squeeze %39 : memref<1x3x64x384xf32, #tpu.memory_space<vmem>> -> memref<3x64x384xf32, #tpu.memory_space<vmem>>
    %c1 = arith.constant 1 : index
    %c0_21 = arith.constant 0 : index
    %c0_22 = arith.constant 0 : index
    %41 = vector.load %40[%c1, %c0_21, %c0_22] : memref<3x64x384xf32, #tpu.memory_space<vmem>>, vector<1x64x384xf32>
    %42 = vector.shape_cast %41 : vector<1x64x384xf32> to vector<64x384xf32>
    %43 = arith.minimumf %38, %42 : vector<64x384xf32>
    %c0_i32_23 = arith.constant 0 : i32
    %c0_i32_24 = arith.constant 0 : i32
    %c0_i32_25 = arith.constant 0 : i32
    %44 = tpu.memref_slice %arg5[%9, %c0_i32_23, %c0_i32_24, %c0_i32_25] : memref<2x3x64x384xf32, #tpu.memory_space<vmem>> -> memref<1x3x64x384xf32, #tpu.memory_space<vmem>>
    %45 = tpu.memref_squeeze %44 : memref<1x3x64x384xf32, #tpu.memory_space<vmem>> -> memref<3x64x384xf32, #tpu.memory_space<vmem>>
    %c2 = arith.constant 2 : index
    %c0_26 = arith.constant 0 : index
    %c0_27 = arith.constant 0 : index
    %46 = vector.load %45[%c2, %c0_26, %c0_27] : memref<3x64x384xf32, #tpu.memory_space<vmem>>, vector<1x64x384xf32>
    %47 = vector.shape_cast %46 : vector<1x64x384xf32> to vector<64x384xf32>
    %48 = arith.minimumf %43, %47 : vector<64x384xf32>
    %c20_i32 = arith.constant 20 : i32
    %49 = tpu.dynamic_rotate %48 by %c20_i32 dim 0 : vector<64x384xf32>, i32 -> vector<64x384xf32>
    %c63_i32 = arith.constant 63 : i32
    %50 = tpu.dynamic_rotate %48 by %c63_i32 dim 0 : vector<64x384xf32>, i32 -> vector<64x384xf32>
    %51 = arith.minimumf %48, %50 : vector<64x384xf32>
    %c62_i32 = arith.constant 62 : i32
    %52 = tpu.dynamic_rotate %51 by %c62_i32 dim 0 : vector<64x384xf32>, i32 -> vector<64x384xf32>
    %53 = arith.minimumf %51, %52 : vector<64x384xf32>
    %c60_i32 = arith.constant 60 : i32
    %54 = tpu.dynamic_rotate %53 by %c60_i32 dim 0 : vector<64x384xf32>, i32 -> vector<64x384xf32>
    %55 = arith.minimumf %53, %54 : vector<64x384xf32>
    %c19_i32 = arith.constant 19 : i32
    %56 = tpu.dynamic_rotate %55 by %c19_i32 dim 0 : vector<64x384xf32>, i32 -> vector<64x384xf32>
    %57 = arith.minimumf %49, %56 : vector<64x384xf32>
    %c56_i32 = arith.constant 56 : i32
    %58 = tpu.dynamic_rotate %55 by %c56_i32 dim 0 : vector<64x384xf32>, i32 -> vector<64x384xf32>
    %59 = arith.minimumf %55, %58 : vector<64x384xf32>
    %c48_i32 = arith.constant 48 : i32
    %60 = tpu.dynamic_rotate %59 by %c48_i32 dim 0 : vector<64x384xf32>, i32 -> vector<64x384xf32>
    %61 = arith.minimumf %59, %60 : vector<64x384xf32>
    %c11_i32 = arith.constant 11 : i32
    %62 = tpu.dynamic_rotate %61 by %c11_i32 dim 0 : vector<64x384xf32>, i32 -> vector<64x384xf32>
    %63 = arith.minimumf %57, %62 : vector<64x384xf32>
    %64 = vector.extract_strided_slice %63 {offsets = [24, 0], sizes = [16, 384], strides = [1, 1]} : vector<64x384xf32> to vector<16x384xf32>
    %c20_i32_28 = arith.constant 20 : i32
    %65 = tpu.dynamic_rotate %64 by %c20_i32_28 dim 1 : vector<16x384xf32>, i32 -> vector<16x384xf32>
    %c383_i32 = arith.constant 383 : i32
    %66 = tpu.dynamic_rotate %64 by %c383_i32 dim 1 : vector<16x384xf32>, i32 -> vector<16x384xf32>
    %67 = arith.minimumf %64, %66 : vector<16x384xf32>
    %c382_i32 = arith.constant 382 : i32
    %68 = tpu.dynamic_rotate %67 by %c382_i32 dim 1 : vector<16x384xf32>, i32 -> vector<16x384xf32>
    %69 = arith.minimumf %67, %68 : vector<16x384xf32>
    %c380_i32 = arith.constant 380 : i32
    %70 = tpu.dynamic_rotate %69 by %c380_i32 dim 1 : vector<16x384xf32>, i32 -> vector<16x384xf32>
    %71 = arith.minimumf %69, %70 : vector<16x384xf32>
    %c19_i32_29 = arith.constant 19 : i32
    %72 = tpu.dynamic_rotate %71 by %c19_i32_29 dim 1 : vector<16x384xf32>, i32 -> vector<16x384xf32>
    %73 = arith.minimumf %65, %72 : vector<16x384xf32>
    %c376_i32 = arith.constant 376 : i32
    %74 = tpu.dynamic_rotate %71 by %c376_i32 dim 1 : vector<16x384xf32>, i32 -> vector<16x384xf32>
    %75 = arith.minimumf %71, %74 : vector<16x384xf32>
    %c368_i32 = arith.constant 368 : i32
    %76 = tpu.dynamic_rotate %75 by %c368_i32 dim 1 : vector<16x384xf32>, i32 -> vector<16x384xf32>
    %77 = arith.minimumf %75, %76 : vector<16x384xf32>
    %c11_i32_30 = arith.constant 11 : i32
    %78 = tpu.dynamic_rotate %77 by %c11_i32_30 dim 1 : vector<16x384xf32>, i32 -> vector<16x384xf32>
    %79 = arith.minimumf %73, %78 : vector<16x384xf32>
    %80 = vector.extract_strided_slice %79 {offsets = [0, 128], sizes = [16, 256], strides = [1, 1]} : vector<16x384xf32> to vector<16x256xf32>
    %81 = math.absf %80 : vector<16x256xf32>
    %c0_31 = arith.constant 0 : index
    %c0_32 = arith.constant 0 : index
    %c0_33 = arith.constant 0 : index
    %c0_34 = arith.constant 0 : index
    %82 = vector.load %arg3[%c0_31, %c0_32, %c0_33, %c0_34] : memref<1x1x16x256xf32, #tpu.memory_space<vmem>>, vector<1x1x16x256xf32>
    %83 = vector.shape_cast %82 : vector<1x1x16x256xf32> to vector<16x256xf32>
    %84 = vector.shape_cast %81 : vector<16x256xf32> to vector<1x1x16x256xf32>
    tpu.vector_store %arg3[%c0_31, %c0_32, %c0_33, %c0_34], %84 {strides = array<i32>} : memref<1x1x16x256xf32, #tpu.memory_space<vmem>>, vector<1x1x16x256xf32>,
    %cst_35 = arith.constant 0.000000e+00 : f32
    %85 = vector.broadcast %cst_35 : f32 to vector<16x256xf32>
    %86 = arith.select %33, %81, %85 : vector<16x256xi1>, vector<16x256xf32>
    %cst_36 = arith.constant dense<0.000000e+00> : vector<16xf32>
    %87 = vector.multi_reduction <add>, %86, %cst_36 [1] : vector<16x256xf32> to vector<16xf32>
    %88 = vector.shape_cast %87 : vector<16xf32> to vector<16x1xf32>
    %cst_37 = arith.constant dense<0.000000e+00> : vector<1xf32>
    %89 = vector.multi_reduction <add>, %88, %cst_37 [0] : vector<16x1xf32> to vector<1xf32>
    %90 = vector.shape_cast %89 : vector<1xf32> to vector<1x1xf32>
    %91 = arith.addf %34, %90 : vector<1x1xf32>
    %92 = vector.shape_cast %91 : vector<1x1xf32> to vector<1x1xf32>
    %93 = vector.broadcast %92 : vector<1x1xf32> to vector<8x128xf32>
    %c0_38 = arith.constant 0 : index
    %c0_39 = arith.constant 0 : index
    %c0_40 = arith.constant 0 : index
    %c0_41 = arith.constant 0 : index
    %94 = vector.load %arg4[%c0_38, %c0_39, %c0_40, %c0_41] : memref<1x1x8x128xf32, #tpu.memory_space<vmem>>, vector<1x1x8x128xf32>
    %95 = vector.shape_cast %94 : vector<1x1x8x128xf32> to vector<8x128xf32>
    %96 = vector.shape_cast %93 : vector<8x128xf32> to vector<1x1x8x128xf32>
    tpu.vector_store %arg4[%c0_38, %c0_39, %c0_40, %c0_41], %96 {strides = array<i32>} : memref<1x1x8x128xf32, #tpu.memory_space<vmem>>, vector<1x1x8x128xf32>,
    return
  }
  func.func @transform_1(%arg0: i32, %arg1: i32) -> (i32, i32, i32, i32) {
    %c0_i32 = arith.constant 0 : i32
    %c0_i32_0 = arith.constant 0 : i32
    %c0_i32_1 = arith.constant 0 : i32
    return %arg0, %c0_i32, %arg1, %c0_i32_0 : i32, i32, i32, i32
  }
  func.func @transform_2(%arg0: i32, %arg1: i32) -> (i32, i32, i32, i32) {
    %c0_i32 = arith.constant 0 : i32
    %c0_i32_0 = arith.constant 0 : i32
    %c0_i32_1 = arith.constant 0 : i32
    return %arg0, %arg1, %c0_i32, %c0_i32_0 : i32, i32, i32, i32
  }
}

</mosaic_0001>

<llo_original>
// kernel: tpu_custom_call.1
$region0: #{tpu_custom_call.1}
  #allocation0 [shape = 'u32[]', space=smem, size = 0x4, offset = 0x4, fixed_abs, tag = 'smem constant byte address 0x4 - core index']
  #allocation1 [shape = 'u32[144,128]{1,0:T(1,128)}', space=vmem, size = 0x12000, scoped, tag = 'internal scratch']
  #allocation2 [shape = 'f32[2,3,64,384]{3,2,1,0:T(8,128)}', space=vmem, size = 0x90000, scoped, tag = 'scratch operand']
  #allocation3 [shape = 's32[2]{0}', space=sflag, size = 0x8, scoped, tag = 'scratch operand']
  #allocation8 [shape = 's32[]', space=sflag, size = 0x4, offset = 0, fixed_abs, tag = 'sflag constant byte address 0x0 - dummy sync flag']
  #allocation9 [shape = 's32[]', space=sflag, size = 0x4, offset = 0, fixed_abs, tag = 'sflag constant byte address 0x0 - dummy sync flag']
  %s0 = inlined_call_operand.hbm [shape: f32[2,3,96,384], index: 0, kind: input, shape index: {}]
  %s1 = inlined_call_operand.hbm [shape: f32[2,1,48,256], index: 1, kind: output, shape index: {0}]
  %s2 = inlined_call_operand.hbm [shape: f32[2,3,8,128], index: 2, kind: output, shape index: {1}]
  %3 = xla_tuple %s1, %s2
  %s4 = sld [smem:[#allocation0]]
  $region41: #{tpu_custom_call.1} parent=0
    _
  %s6 = ssub.s32 1, %s4
  %s7 = scalar_select 0, %s6, %s4
  $region1: #{tpu_custom_call.1} parent=0
    #allocation4 [shape = 'u8[32768]{0}', space=vmem, size = 0x8000, scoped, tag = 'output window, operand 0']
    #allocation5 [shape = 's32[2]{0}', space=sflag, size = 0x8, scoped, tag = 'scoped memory for tpu_custom_call.1']
    #allocation6 [shape = 'u8[8192]{0}', space=vmem, size = 0x2000, scoped, tag = 'output window, operand 1']
    #allocation7 [shape = 's32[2]{0}', space=sflag, size = 0x8, scoped, tag = 'scoped memory for tpu_custom_call.1']
    %8 = vsyncpa [#allocation5], 0
    %s9 = scalar_lea.sflag [#allocation5], 1
    %10 = vsyncpa %s9, 0
    %11 = vsyncpa [#allocation7], 0
    %s12 = scalar_lea.sflag [#allocation7], 1
    %13 = vsyncpa %s12, 0
    loop: start=0, step=1, limit=7
    $region2: #{tpu_custom_call.1} parent=1 // loop_pre_header
      _
    $region3: #{tpu_custom_call.1} parent=1 // loop_header
      %s15 = sphi 0, %s19
      %p16 = scmp.ge.s32.totalorder %s15, 7
      %s21 = sphi 0, %s31
      %s22 = sphi 0, %s27
      %s23 = sphi 0, %s21
      %s24 = sphi 0, %s22
      %s36 = sphi 0, %s38
      %s39 = sphi 0, %s36
      %s49 = sphi 0, %s39
      %s57 = sphi 0, %s59
      %s60 = sphi 0, %s57
      %s70 = sphi 0, %s60
    $region4: #{tpu_custom_call.1} parent=1 // loop_header_branch
      %18 = sbr.rel (%p16) target = $region8
    $region5: #{tpu_custom_call.1} parent=1 // loop_body
      %s20 = ssub.s32 %s15, 1
      %s25 = sadd.s32 1, %s22
      %p26 = scmp.ge.s32.totalorder %s25, 3
      %s27 = scalar_select %p26, 0, %s25
      %s28 = sadd.s32 1, %s21
      %s29 = scalar_select %p26, %s28, %s21
      %p30 = scmp.ge.s32.totalorder %s29, 2
      %s31 = scalar_select %p30, 0, %s29
      %s32 = ssub.s32 %s21, %s31
      %s33 = ssub.s32 %s22, %s27
      %s34 = sor.u32 %s32, %s33
      %p35 = scmp.eq.s32.totalorder %s34, 0
      %s37 = sadd.s32 %s36, 1
      %s38 = scalar_select %p35, %s36, %s37
      %p40 = pneg %p35
      %p41 = scmp.eq.s32.totalorder %s15, 5
      %p42 = por %p40, %p41
      %p43 = scmp.ne.s32.totalorder %s36, %s39
      %p44 = scmp.eq.s32.totalorder %s15, 0
      %p45 = por %p43, %p44
      %p46 = scmp.ne.s32.totalorder %s36, %s39
      %p47 = scmp.eq.s32.totalorder %s20, 5
      %p48 = por %p46, %p47
      %p50 = scmp.ne.s32.totalorder %s39, %s49
      %p51 = scmp.eq.s32.totalorder %s20, 0
      %p52 = por %p50, %p51
      %s53 = ssub.s32 %s21, %s31
      %s54 = ssub.s32 %s22, %s27
      %s55 = sor.u32 %s53, %s54
      %p56 = scmp.eq.s32.totalorder %s55, 0
      %s58 = sadd.s32 %s57, 1
      %s59 = scalar_select %p56, %s57, %s58
      %p61 = pneg %p56
      %p62 = scmp.eq.s32.totalorder %s15, 5
      %p63 = por %p61, %p62
      %p64 = scmp.ne.s32.totalorder %s57, %s60
      %p65 = scmp.eq.s32.totalorder %s15, 0
      %p66 = por %p64, %p65
      %p67 = scmp.ne.s32.totalorder %s57, %s60
      %p68 = scmp.eq.s32.totalorder %s20, 5
      %p69 = por %p67, %p68
      %p71 = scmp.ne.s32.totalorder %s60, %s70
      %p72 = scmp.eq.s32.totalorder %s20, 0
      %p73 = por %p71, %p72
      %p74 = scmp.lt.s32.totalorder %s15, 6
      // Predicated region
      $region9: #{tpu_custom_call.1} parent=5 // pred_check
        %p75 = pneg %p74
      $region10: #{tpu_custom_call.1} parent=5 // pred_check_branch
        %77 = sbr.rel (%p75) target = $region12
      $region11: #{tpu_custom_call.1} parent=5 // pred_region
        %p78 = pneg %p45
        %p79 = pneg %p42
        %s80 = sand.u32 %s36, 1
        %s81 = scalar_lea.sflag [#allocation5], %s80
        %s82 = sand.u32 %s36, 1
        %s83 = smul.addr %s82, 32
        %s84 = scalar_lea.vmem [#allocation4], %s83
        %p85 = pneg %p66
        %p86 = pneg %p63
        %s87 = sand.u32 %s57, 1
        %s88 = scalar_lea.sflag [#allocation7], %s87
        %s89 = sand.u32 %s57, 1
        %s90 = smul.addr %s89, 8
        %s91 = scalar_lea.vmem [#allocation6], %s90
        %s92 = smul.u32 2, %s22
        %p93 = scmp.lt.s32.totalorder %s22, 0
        %s94 = ssub.s32 0, %s22
        %s95 = scalar_select %p93, %s94, %s22
        %s96 = sand.u32 %s95, 1
        %s97 = ssub.s32 0, %s96
        %s98 = scalar_select %p93, %s97, %s96
        %p99 = scmp.ne.s32.totalorder %s98, 0
        %p100 = scmp.lt.s32.totalorder %s98, 0
        %p101 = pnand %p100, %p99
        %p102 = pneg %p101
        %s103 = sadd.s32 %s98, 2
        %s104 = scalar_select %p102, %s103, %s98
        %p105 = scmp.eq.s32.totalorder %s22, 0
        // Predicated region
        $region13: #{tpu_custom_call.1} parent=11 // pred_check
          %p106 = pneg %p105
        $region14: #{tpu_custom_call.1} parent=11 // pred_check_branch
          %108 = sbr.rel (%p106) target = $region16
        $region15: #{tpu_custom_call.1} parent=11 // pred_region
          %s109 = smul.u32 %s22, 16
          %s110 = sshra.s32 %s109, 3
          %s111 = sand.u32 %s109, 7
          %s112 = smul.u32 %s110, 3
          %s113 = smul.u32 %s21, 108
          %s114 = sadd.s32 %s112, %s113
          %s115 = smul.addr %s114, 128
          %s116 = scalar_lea.hbm %s0, %s115
          %s117 = smul.u32 %s104, 72
          %s118 = smul.addr %s117, 8
          %s119 = scalar_lea.vmem [#allocation2], %s118
          %s120 = scalar_lea.sflag [#allocation3], %s104
          %s122 = sshll.u32 %s119, 4
          %s123 = int_to_ptr.vmem [resolvable:$true] %s122
          %125 = dma.hbm_to_vmem [thread:$0]  %s116, 9216, %s123, %s120, 4608, 3072, 192
        $region16: #{tpu_custom_call.1} parent=11 // pred_fallthru
          _
        %s126 = sadd.s32 %s22, 1
        %p127 = scmp.lt.s32.totalorder %s126, 3
        // Predicated region
        $region17: #{tpu_custom_call.1} parent=11 // pred_check
          %p128 = pneg %p127
        $region18: #{tpu_custom_call.1} parent=11 // pred_check_branch
          %130 = sbr.rel (%p128) target = $region20
        $region19: #{tpu_custom_call.1} parent=11 // pred_region
          %s131 = ssub.s32 1, %s104
          %s132 = smul.u32 %s126, 16
          %s133 = sshra.s32 %s132, 3
          %s134 = sand.u32 %s132, 7
          %s135 = smul.u32 %s133, 3
          %s136 = smul.u32 %s21, 108
          %s137 = sadd.s32 %s135, %s136
          %s138 = smul.addr %s137, 128
          %s139 = scalar_lea.hbm %s0, %s138
          %s140 = smul.u32 %s131, 72
          %s141 = smul.addr %s140, 8
          %s142 = scalar_lea.vmem [#allocation2], %s141
          %s143 = scalar_lea.sflag [#allocation3], %s131
          %s145 = sshll.u32 %s142, 4
          %s146 = int_to_ptr.vmem [resolvable:$true] %s145
          %148 = dma.hbm_to_vmem [thread:$0]  %s139, 9216, %s146, %s143, 4608, 3072, 192
        $region20: #{tpu_custom_call.1} parent=11 // pred_fallthru
          _
        %s149 = smul.u32 %s22, 16
        %s150 = smul.u32 %s104, 72
        %s151 = smul.addr %s150, 8
        %s152 = scalar_lea.vmem [#allocation2], %s151
        %s153 = scalar_lea.sflag [#allocation3], %s104
        %s154 = smul.u32 8, 3
        %s155 = smul.u32 %s154, 8
        %s156 = smul.u32 %s155, 3
        %s157 = sshll.u32 %s156, 4
        %158 = dma.done %s153, %s157
        %v159 = vlaneseq
        %v160 = vshrl.u32 %v159, 7
        %v161 = vadd.s32 %v160, 8
        %v162 = vlaneseq
        %v163 = vand.u32 %v162, 127
        %v164 = vadd.s32 %v163, 128
        %s165 = ssub.s32 44, %s149
        %v166 = vstv %s165
        %vm167 = vcmp.lt.s32.totalorder %v160, %v166
        %vm168 = vcmp.lt.s32.totalorder %v161, %v166
        %vm169 = vcmp.lt.s32.totalorder %v163, 200
        %vm170 = vcmp.lt.s32.totalorder %v164, 200
        %vm171 = vmand %vm167, %vm169
        %vm172 = vmand %vm167, %vm170
        %vm173 = vmand %vm168, %vm169
        %vm174 = vmand %vm168, %vm170
        %v175 = vld [vmem:[%s152] sm:$0xff]
        %v176 = vld [vmem:[%s152 + $0x8] sm:$0xff]
        %v177 = vld [vmem:[%s152 + $0x10] sm:$0xff]
        %v178 = vld [vmem:[%s152 + $0x18] sm:$0xff]
        %v179 = vld [vmem:[%s152 + $0x20] sm:$0xff]
        %v180 = vld [vmem:[%s152 + $0x28] sm:$0xff]
        %v181 = vld [vmem:[%s152 + $0x30] sm:$0xff]
        %v182 = vld [vmem:[%s152 + $0x38] sm:$0xff]
        %v183 = vld [vmem:[%s152 + $0x40] sm:$0xff]
        %v184 = vld [vmem:[%s152 + $0x48] sm:$0xff]
        %v185 = vld [vmem:[%s152 + $0x50] sm:$0xff]
        %v186 = vld [vmem:[%s152 + $0x58] sm:$0xff]
        %v187 = vld [vmem:[%s152 + $0x60] sm:$0xff]
        %v188 = vld [vmem:[%s152 + $0x68] sm:$0xff]
        %v189 = vld [vmem:[%s152 + $0x70] sm:$0xff]
        %v190 = vld [vmem:[%s152 + $0x78] sm:$0xff]
        %v191 = vld [vmem:[%s152 + $0x80] sm:$0xff]
        %v192 = vld [vmem:[%s152 + $0x88] sm:$0xff]
        %v193 = vld [vmem:[%s152 + $0x90] sm:$0xff]
        %v194 = vld [vmem:[%s152 + $0x98] sm:$0xff]
        %v195 = vld [vmem:[%s152 + $0xa0] sm:$0xff]
        %v196 = vld [vmem:[%s152 + $0xa8] sm:$0xff]
        %v197 = vld [vmem:[%s152 + $0xb0] sm:$0xff]
        %v198 = vld [vmem:[%s152 + $0xb8] sm:$0xff]
        %s199 = scalar_lea.vmem %s152, 192 [#allocation2]
        %v200 = vld [vmem:[%s199] sm:$0xff]
        %v201 = vld [vmem:[%s199 + $0x8] sm:$0xff]
        %v202 = vld [vmem:[%s199 + $0x10] sm:$0xff]
        %v203 = vld [vmem:[%s199 + $0x18] sm:$0xff]
        %v204 = vld [vmem:[%s199 + $0x20] sm:$0xff]
        %v205 = vld [vmem:[%s199 + $0x28] sm:$0xff]
        %v206 = vld [vmem:[%s199 + $0x30] sm:$0xff]
        %v207 = vld [vmem:[%s199 + $0x38] sm:$0xff]
        %v208 = vld [vmem:[%s199 + $0x40] sm:$0xff]
        %v209 = vld [vmem:[%s199 + $0x48] sm:$0xff]
        %v210 = vld [vmem:[%s199 + $0x50] sm:$0xff]
        %v211 = vld [vmem:[%s199 + $0x58] sm:$0xff]
        %v212 = vld [vmem:[%s199 + $0x60] sm:$0xff]
        %v213 = vld [vmem:[%s199 + $0x68] sm:$0xff]
        %v214 = vld [vmem:[%s199 + $0x70] sm:$0xff]
        %v215 = vld [vmem:[%s199 + $0x78] sm:$0xff]
        %v216 = vld [vmem:[%s199 + $0x80] sm:$0xff]
        %v217 = vld [vmem:[%s199 + $0x88] sm:$0xff]
        %v218 = vld [vmem:[%s199 + $0x90] sm:$0xff]
        %v219 = vld [vmem:[%s199 + $0x98] sm:$0xff]
        %v220 = vld [vmem:[%s199 + $0xa0] sm:$0xff]
        %v221 = vld [vmem:[%s199 + $0xa8] sm:$0xff]
        %v222 = vld [vmem:[%s199 + $0xb0] sm:$0xff]
        %v223 = vld [vmem:[%s199 + $0xb8] sm:$0xff]
        %v224 = vmin.f32 %v175, %v200
        %v225 = vmin.f32 %v176, %v201
        %v226 = vmin.f32 %v177, %v202
        %v227 = vmin.f32 %v178, %v203
        %v228 = vmin.f32 %v179, %v204
        %v229 = vmin.f32 %v180, %v205
        %v230 = vmin.f32 %v181, %v206
        %v231 = vmin.f32 %v182, %v207
        %v232 = vmin.f32 %v183, %v208
        %v233 = vmin.f32 %v184, %v209
        %v234 = vmin.f32 %v185, %v210
        %v235 = vmin.f32 %v186, %v211
        %v236 = vmin.f32 %v187, %v212
        %v237 = vmin.f32 %v188, %v213
        %v238 = vmin.f32 %v189, %v214
        %v239 = vmin.f32 %v190, %v215
        %v240 = vmin.f32 %v191, %v216
        %v241 = vmin.f32 %v192, %v217
        %v242 = vmin.f32 %v193, %v218
        %v243 = vmin.f32 %v194, %v219
        %v244 = vmin.f32 %v195, %v220
        %v245 = vmin.f32 %v196, %v221
        %v246 = vmin.f32 %v197, %v222
        %v247 = vmin.f32 %v198, %v223
        %s248 = scalar_lea.vmem %s152, 384 [#allocation2]
        %v249 = vld [vmem:[%s248] sm:$0xff]
        %v250 = vld [vmem:[%s248 + $0x8] sm:$0xff]
        %v251 = vld [vmem:[%s248 + $0x10] sm:$0xff]
        %v252 = vld [vmem:[%s248 + $0x18] sm:$0xff]
        %v253 = vld [vmem:[%s248 + $0x20] sm:$0xff]
        %v254 = vld [vmem:[%s248 + $0x28] sm:$0xff]
        %v255 = vld [vmem:[%s248 + $0x30] sm:$0xff]
        %v256 = vld [vmem:[%s248 + $0x38] sm:$0xff]
        %v257 = vld [vmem:[%s248 + $0x40] sm:$0xff]
        %v258 = vld [vmem:[%s248 + $0x48] sm:$0xff]
        %v259 = vld [vmem:[%s248 + $0x50] sm:$0xff]
        %v260 = vld [vmem:[%s248 + $0x58] sm:$0xff]
        %v261 = vld [vmem:[%s248 + $0x60] sm:$0xff]
        %v262 = vld [vmem:[%s248 + $0x68] sm:$0xff]
        %v263 = vld [vmem:[%s248 + $0x70] sm:$0xff]
        %v264 = vld [vmem:[%s248 + $0x78] sm:$0xff]
        %v265 = vld [vmem:[%s248 + $0x80] sm:$0xff]
        %v266 = vld [vmem:[%s248 + $0x88] sm:$0xff]
        %v267 = vld [vmem:[%s248 + $0x90] sm:$0xff]
        %v268 = vld [vmem:[%s248 + $0x98] sm:$0xff]
        %v269 = vld [vmem:[%s248 + $0xa0] sm:$0xff]
        %v270 = vld [vmem:[%s248 + $0xa8] sm:$0xff]
        %v271 = vld [vmem:[%s248 + $0xb0] sm:$0xff]
        %v272 = vld [vmem:[%s248 + $0xb8] sm:$0xff]
        %v273 = vmin.f32 %v224, %v249
        %v274 = vmin.f32 %v225, %v250
        %v275 = vmin.f32 %v226, %v251
        %v276 = vmin.f32 %v227, %v252
        %v277 = vmin.f32 %v228, %v253
        %v278 = vmin.f32 %v229, %v254
        %v279 = vmin.f32 %v230, %v255
        %v280 = vmin.f32 %v231, %v256
        %v281 = vmin.f32 %v232, %v257
        %v282 = vmin.f32 %v233, %v258
        %v283 = vmin.f32 %v234, %v259
        %v284 = vmin.f32 %v235, %v260
        %v285 = vmin.f32 %v236, %v261
        %v286 = vmin.f32 %v237, %v262
        %v287 = vmin.f32 %v238, %v263
        %v288 = vmin.f32 %v239, %v264
        %v289 = vmin.f32 %v240, %v265
        %v290 = vmin.f32 %v241, %v266
        %v291 = vmin.f32 %v242, %v267
        %v292 = vmin.f32 %v243, %v268
        %v293 = vmin.f32 %v244, %v269
        %v294 = vmin.f32 %v245, %v270
        %v295 = vmin.f32 %v246, %v271
        %v296 = vmin.f32 %v247, %v272
        %v297 = vrot.slane %v273, 4
        %v298 = vrot.slane %v274, 4
        %v299 = vrot.slane %v275, 4
        %v300 = vrot.slane %v276, 4
        %v301 = vrot.slane %v277, 4
        %v302 = vrot.slane %v278, 4
        %v303 = vrot.slane %v279, 4
        %v304 = vrot.slane %v280, 4
        %v305 = vrot.slane %v281, 4
        %vm306 = vcmp.lt.s32.totalorder %v160, 4
        %v307 = vsel %vm306, %v300, %v303
        %v308 = vsel %vm306, %v301, %v304
        %v309 = vsel %vm306, %v302, %v305
        %v310 = vsel %vm306, %v297, %v300
        %v311 = vsel %vm306, %v298, %v301
        %v312 = vsel %vm306, %v299, %v302
        %v313 = vrot.slane %v273, 1
        %v314 = vrot.slane %v274, 1
        %v315 = vrot.slane %v275, 1
        %v316 = vrot.slane %v276, 1
        %v317 = vrot.slane %v277, 1
        %v318 = vrot.slane %v278, 1
        %v319 = vrot.slane %v279, 1
        %v320 = vrot.slane %v280, 1
        %v321 = vrot.slane %v281, 1
        %v322 = vrot.slane %v282, 1
        %v323 = vrot.slane %v283, 1
        %v324 = vrot.slane %v284, 1
        %v325 = vrot.slane %v285, 1
        %v326 = vrot.slane %v286, 1
        %v327 = vrot.slane %v287, 1
        %v328 = vrot.slane %v288, 1
        %v329 = vrot.slane %v289, 1
        %v330 = vrot.slane %v290, 1
        %v331 = vrot.slane %v291, 1
        %v332 = vrot.slane %v292, 1
        %v333 = vrot.slane %v293, 1
        %v334 = vrot.slane %v294, 1
        %v335 = vrot.slane %v295, 1
        %v336 = vrot.slane %v296, 1
        %vm337 = vcmp.lt.s32.totalorder %v160, 7
        %v338 = vsel %vm337, %v331, %v334
        %v339 = vsel %vm337, %v332, %v335
        %v340 = vsel %vm337, %v333, %v336
        %v341 = vsel %vm337, %v328, %v331
        %v342 = vsel %vm337, %v329, %v332
        %v343 = vsel %vm337, %v330, %v333
        %v344 = vsel %vm337, %v325, %v328
        %v345 = vsel %vm337, %v326, %v329
        %v346 = vsel %vm337, %v327, %v330
        %v347 = vsel %vm337, %v322, %v325
        %v348 = vsel %vm337, %v323, %v326
        %v349 = vsel %vm337, %v324, %v327
        %v350 = vsel %vm337, %v319, %v322
        %v351 = vsel %vm337, %v320, %v323
        %v352 = vsel %vm337, %v321, %v324
        %v353 = vsel %vm337, %v316, %v319
        %v354 = vsel %vm337, %v317, %v320
        %v355 = vsel %vm337, %v318, %v321
        %v356 = vsel %vm337, %v313, %v316
        %v357 = vsel %vm337, %v314, %v317
        %v358 = vsel %vm337, %v315, %v318
        %v359 = vsel %vm337, %v334, %v313
        %v360 = vsel %vm337, %v335, %v314
        %v361 = vsel %vm337, %v336, %v315
        %v362 = vmin.f32 %v273, %v356
        %v363 = vmin.f32 %v274, %v357
        %v364 = vmin.f32 %v275, %v358
        %v365 = vmin.f32 %v276, %v353
        %v366 = vmin.f32 %v277, %v354
        %v367 = vmin.f32 %v278, %v355
        %v368 = vmin.f32 %v279, %v350
        %v369 = vmin.f32 %v280, %v351
        %v370 = vmin.f32 %v281, %v352
        %v371 = vmin.f32 %v282, %v347
        %v372 = vmin.f32 %v283, %v348
        %v373 = vmin.f32 %v284, %v349
        %v374 = vmin.f32 %v285, %v344
        %v375 = vmin.f32 %v286, %v345
        %v376 = vmin.f32 %v287, %v346
        %v377 = vmin.f32 %v288, %v341
        %v378 = vmin.f32 %v289, %v342
        %v379 = vmin.f32 %v290, %v343
        %v380 = vmin.f32 %v291, %v338
        %v381 = vmin.f32 %v292, %v339
        %v382 = vmin.f32 %v293, %v340
        %v383 = vmin.f32 %v294, %v359
        %v384 = vmin.f32 %v295, %v360
        %v385 = vmin.f32 %v296, %v361
        %v386 = vrot.slane %v362, 2
        %v387 = vrot.slane %v363, 2
        %v388 = vrot.slane %v364, 2
        %v389 = vrot.slane %v365, 2
        %v390 = vrot.slane %v366, 2
        %v391 = vrot.slane %v367, 2
        %v392 = vrot.slane %v368, 2
        %v393 = vrot.slane %v369, 2
        %v394 = vrot.slane %v370, 2
        %v395 = vrot.slane %v371, 2
        %v396 = vrot.slane %v372, 2
        %v397 = vrot.slane %v373, 2
        %v398 = vrot.slane %v374, 2
        %v399 = vrot.slane %v375, 2
        %v400 = vrot.slane %v376, 2
        %v401 = vrot.slane %v377, 2
        %v402 = vrot.slane %v378, 2
        %v403 = vrot.slane %v379, 2
        %v404 = vrot.slane %v380, 2
        %v405 = vrot.slane %v381, 2
        %v406 = vrot.slane %v382, 2
        %v407 = vrot.slane %v383, 2
        %v408 = vrot.slane %v384, 2
        %v409 = vrot.slane %v385, 2
        %vm410 = vcmp.lt.s32.totalorder %v160, 6
        %v411 = vsel %vm410, %v404, %v407
        %v412 = vsel %vm410, %v405, %v408
        %v413 = vsel %vm410, %v406, %v409
        %v414 = vsel %vm410, %v401, %v404
        %v415 = vsel %vm410, %v402, %v405
        %v416 = vsel %vm410, %v403, %v406
        %v417 = vsel %vm410, %v398, %v401
        %v418 = vsel %vm410, %v399, %v402
        %v419 = vsel %vm410, %v400, %v403
        %v420 = vsel %vm410, %v395, %v398
        %v421 = vsel %vm410, %v396, %v399
        %v422 = vsel %vm410, %v397, %v400
        %v423 = vsel %vm410, %v392, %v395
        %v424 = vsel %vm410, %v393, %v396
        %v425 = vsel %vm410, %v394, %v397
        %v426 = vsel %vm410, %v389, %v392
        %v427 = vsel %vm410, %v390, %v393
        %v428 = vsel %vm410, %v391, %v394
        %v429 = vsel %vm410, %v386, %v389
        %v430 = vsel %vm410, %v387, %v390
        %v431 = vsel %vm410, %v388, %v391
        %v432 = vsel %vm410, %v407, %v386
        %v433 = vsel %vm410, %v408, %v387
        %v434 = vsel %vm410, %v409, %v388
        %v435 = vmin.f32 %v362, %v429
        %v436 = vmin.f32 %v363, %v430
        %v437 = vmin.f32 %v364, %v431
        %v438 = vmin.f32 %v365, %v426
        %v439 = vmin.f32 %v366, %v427
        %v440 = vmin.f32 %v367, %v428
        %v441 = vmin.f32 %v368, %v423
        %v442 = vmin.f32 %v369, %v424
        %v443 = vmin.f32 %v370, %v425
        %v444 = vmin.f32 %v371, %v420
        %v445 = vmin.f32 %v372, %v421
        %v446 = vmin.f32 %v373, %v422
        %v447 = vmin.f32 %v374, %v417
        %v448 = vmin.f32 %v375, %v418
        %v449 = vmin.f32 %v376, %v419
        %v450 = vmin.f32 %v377, %v414
        %v451 = vmin.f32 %v378, %v415
        %v452 = vmin.f32 %v379, %v416
        %v453 = vmin.f32 %v380, %v411
        %v454 = vmin.f32 %v381, %v412
        %v455 = vmin.f32 %v382, %v413
        %v456 = vmin.f32 %v383, %v432
        %v457 = vmin.f32 %v384, %v433
        %v458 = vmin.f32 %v385, %v434
        %v459 = vrot.slane %v435, 4
        %v460 = vrot.slane %v436, 4
        %v461 = vrot.slane %v437, 4
        %v462 = vrot.slane %v438, 4
        %v463 = vrot.slane %v439, 4
        %v464 = vrot.slane %v440, 4
        %v465 = vrot.slane %v441, 4
        %v466 = vrot.slane %v442, 4
        %v467 = vrot.slane %v443, 4
        %v468 = vrot.slane %v444, 4
        %v469 = vrot.slane %v445, 4
        %v470 = vrot.slane %v446, 4
        %v471 = vrot.slane %v447, 4
        %v472 = vrot.slane %v448, 4
        %v473 = vrot.slane %v449, 4
        %v474 = vrot.slane %v450, 4
        %v475 = vrot.slane %v451, 4
        %v476 = vrot.slane %v452, 4
        %v477 = vrot.slane %v453, 4
        %v478 = vrot.slane %v454, 4
        %v479 = vrot.slane %v455, 4
        %v480 = vrot.slane %v456, 4
        %v481 = vrot.slane %v457, 4
        %v482 = vrot.slane %v458, 4
        %v483 = vsel %vm306, %v477, %v480
        %v484 = vsel %vm306, %v478, %v481
        %v485 = vsel %vm306, %v479, %v482
        %v486 = vsel %vm306, %v474, %v477
        %v487 = vsel %vm306, %v475, %v478
        %v488 = vsel %vm306, %v476, %v479
        %v489 = vsel %vm306, %v471, %v474
        %v490 = vsel %vm306, %v472, %v475
        %v491 = vsel %vm306, %v473, %v476
        %v492 = vsel %vm306, %v468, %v471
        %v493 = vsel %vm306, %v469, %v472
        %v494 = vsel %vm306, %v470, %v473
        %v495 = vsel %vm306, %v465, %v468
        %v496 = vsel %vm306, %v466, %v469
        %v497 = vsel %vm306, %v467, %v470
        %v498 = vsel %vm306, %v462, %v465
        %v499 = vsel %vm306, %v463, %v466
        %v500 = vsel %vm306, %v464, %v467
        %v501 = vsel %vm306, %v459, %v462
        %v502 = vsel %vm306, %v460, %v463
        %v503 = vsel %vm306, %v461, %v464
        %v504 = vmin.f32 %v435, %v501
        %v505 = vmin.f32 %v436, %v502
        %v506 = vmin.f32 %v437, %v503
        %v507 = vmin.f32 %v438, %v498
        %v508 = vmin.f32 %v439, %v499
        %v509 = vmin.f32 %v440, %v500
        %v510 = vmin.f32 %v441, %v495
        %v511 = vmin.f32 %v442, %v496
        %v512 = vmin.f32 %v443, %v497
        %v513 = vmin.f32 %v444, %v492
        %v514 = vmin.f32 %v445, %v493
        %v515 = vmin.f32 %v446, %v494
        %v516 = vmin.f32 %v447, %v489
        %v517 = vmin.f32 %v448, %v490
        %v518 = vmin.f32 %v449, %v491
        %v519 = vmin.f32 %v450, %v486
        %v520 = vmin.f32 %v451, %v487
        %v521 = vmin.f32 %v452, %v488
        %v522 = vmin.f32 %v453, %v483
        %v523 = vmin.f32 %v454, %v484
        %v524 = vmin.f32 %v455, %v485
        %v525 = vrot.slane %v504, 5
        %v526 = vrot.slane %v505, 5
        %v527 = vrot.slane %v506, 5
        %v528 = vrot.slane %v507, 5
        %v529 = vrot.slane %v508, 5
        %v530 = vrot.slane %v509, 5
        %v531 = vrot.slane %v510, 5
        %v532 = vrot.slane %v511, 5
        %v533 = vrot.slane %v512, 5
        %vm534 = vcmp.lt.s32.totalorder %v160, 3
        %v535 = vsel %vm534, %v528, %v531
        %v536 = vsel %vm534, %v529, %v532
        %v537 = vsel %vm534, %v530, %v533
        %v538 = vsel %vm534, %v525, %v528
        %v539 = vsel %vm534, %v526, %v529
        %v540 = vsel %vm534, %v527, %v530
        %v541 = vmin.f32 %v310, %v538
        %v542 = vmin.f32 %v311, %v539
        %v543 = vmin.f32 %v312, %v540
        %v544 = vmin.f32 %v307, %v535
        %v545 = vmin.f32 %v308, %v536
        %v546 = vmin.f32 %v309, %v537
        %v547 = vmin.f32 %v507, %v510
        %v548 = vmin.f32 %v508, %v511
        %v549 = vmin.f32 %v509, %v512
        %v550 = vmin.f32 %v510, %v513
        %v551 = vmin.f32 %v511, %v514
        %v552 = vmin.f32 %v512, %v515
        %v553 = vmin.f32 %v513, %v516
        %v554 = vmin.f32 %v514, %v517
        %v555 = vmin.f32 %v515, %v518
        %v556 = vmin.f32 %v516, %v519
        %v557 = vmin.f32 %v517, %v520
        %v558 = vmin.f32 %v518, %v521
        %v559 = vmin.f32 %v519, %v522
        %v560 = vmin.f32 %v520, %v523
        %v561 = vmin.f32 %v521, %v524
        %v562 = vmin.f32 %v547, %v553
        %v563 = vmin.f32 %v548, %v554
        %v564 = vmin.f32 %v549, %v555
        %v565 = vmin.f32 %v550, %v556
        %v566 = vmin.f32 %v551, %v557
        %v567 = vmin.f32 %v552, %v558
        %v568 = vmin.f32 %v553, %v559
        %v569 = vmin.f32 %v554, %v560
        %v570 = vmin.f32 %v555, %v561
        %v571 = vrot.slane %v562, 5
        %v572 = vrot.slane %v563, 5
        %v573 = vrot.slane %v564, 5
        %v574 = vrot.slane %v565, 5
        %v575 = vrot.slane %v566, 5
        %v576 = vrot.slane %v567, 5
        %v577 = vrot.slane %v568, 5
        %v578 = vrot.slane %v569, 5
        %v579 = vrot.slane %v570, 5
        %v580 = vsel %vm534, %v574, %v577
        %v581 = vsel %vm534, %v575, %v578
        %v582 = vsel %vm534, %v576, %v579
        %v583 = vsel %vm534, %v571, %v574
        %v584 = vsel %vm534, %v572, %v575
        %v585 = vsel %vm534, %v573, %v576
        %v586 = vmin.f32 %v541, %v583
        %v587 = vmin.f32 %v542, %v584
        %v588 = vmin.f32 %v543, %v585
        %v589 = vmin.f32 %v544, %v580
        %v590 = vmin.f32 %v545, %v581
        %v591 = vmin.f32 %v546, %v582
        %592 = vrot.lane.b32.xlu0 %v586, 20
        %v593 = vpop.permute.xlu0 %592
        %594 = vrot.lane.b32.xlu0 %v589, 20
        %v595 = vpop.permute.xlu0 %594
        %596 = vrot.lane.b32.xlu0 %v587, 20
        %v597 = vpop.permute.xlu0 %596
        %598 = vrot.lane.b32.xlu0 %v590, 20
        %v599 = vpop.permute.xlu0 %598
        %600 = vrot.lane.b32.xlu0 %v588, 20
        %v601 = vpop.permute.xlu0 %600
        %602 = vrot.lane.b32.xlu0 %v591, 20
        %v603 = vpop.permute.xlu0 %602
        %vm604 = vcmp.lt.s32.totalorder %v163, 20
        %v605 = vsel %vm604, %v597, %v601
        %v606 = vsel %vm604, %v599, %v603
        %v607 = vsel %vm604, %v593, %v597
        %v608 = vsel %vm604, %v595, %v599
        %609 = vrot.lane.b32.xlu0 %v586, 127
        %v610 = vpop.permute.xlu0 %609
        %611 = vrot.lane.b32.xlu0 %v589, 127
        %v612 = vpop.permute.xlu0 %611
        %613 = vrot.lane.b32.xlu0 %v587, 127
        %v614 = vpop.permute.xlu0 %613
        %615 = vrot.lane.b32.xlu0 %v590, 127
        %v616 = vpop.permute.xlu0 %615
        %617 = vrot.lane.b32.xlu0 %v588, 127
        %v618 = vpop.permute.xlu0 %617
        %619 = vrot.lane.b32.xlu0 %v591, 127
        %v620 = vpop.permute.xlu0 %619
        %vm621 = vcmp.lt.s32.totalorder %v163, 127
        %v622 = vsel %vm621, %v614, %v618
        %v623 = vsel %vm621, %v616, %v620
        %v624 = vsel %vm621, %v610, %v614
        %v625 = vsel %vm621, %v612, %v616
        %v626 = vsel %vm621, %v618, %v610
        %v627 = vsel %vm621, %v620, %v612
        %v628 = vmin.f32 %v586, %v624
        %v629 = vmin.f32 %v587, %v622
        %v630 = vmin.f32 %v588, %v626
        %v631 = vmin.f32 %v589, %v625
        %v632 = vmin.f32 %v590, %v623
        %v633 = vmin.f32 %v591, %v627
        %634 = vrot.lane.b32.xlu0 %v628, 126
        %v635 = vpop.permute.xlu0 %634
        %636 = vrot.lane.b32.xlu0 %v631, 126
        %v637 = vpop.permute.xlu0 %636
        %638 = vrot.lane.b32.xlu0 %v629, 126
        %v639 = vpop.permute.xlu0 %638
        %640 = vrot.lane.b32.xlu0 %v632, 126
        %v641 = vpop.permute.xlu0 %640
        %642 = vrot.lane.b32.xlu0 %v630, 126
        %v643 = vpop.permute.xlu0 %642
        %644 = vrot.lane.b32.xlu0 %v633, 126
        %v645 = vpop.permute.xlu0 %644
        %vm646 = vcmp.lt.s32.totalorder %v163, 126
        %v647 = vsel %vm646, %v639, %v643
        %v648 = vsel %vm646, %v641, %v645
        %v649 = vsel %vm646, %v635, %v639
        %v650 = vsel %vm646, %v637, %v641
        %v651 = vsel %vm646, %v643, %v635
        %v652 = vsel %vm646, %v645, %v637
        %v653 = vmin.f32 %v628, %v649
        %v654 = vmin.f32 %v629, %v647
        %v655 = vmin.f32 %v630, %v651
        %v656 = vmin.f32 %v631, %v650
        %v657 = vmin.f32 %v632, %v648
        %v658 = vmin.f32 %v633, %v652
        %659 = vrot.lane.b32.xlu0 %v653, 124
        %v660 = vpop.permute.xlu0 %659
        %661 = vrot.lane.b32.xlu0 %v656, 124
        %v662 = vpop.permute.xlu0 %661
        %663 = vrot.lane.b32.xlu0 %v654, 124
        %v664 = vpop.permute.xlu0 %663
        %665 = vrot.lane.b32.xlu0 %v657, 124
        %v666 = vpop.permute.xlu0 %665
        %667 = vrot.lane.b32.xlu0 %v655, 124
        %v668 = vpop.permute.xlu0 %667
        %669 = vrot.lane.b32.xlu0 %v658, 124
        %v670 = vpop.permute.xlu0 %669
        %vm671 = vcmp.lt.s32.totalorder %v163, 124
        %v672 = vsel %vm671, %v664, %v668
        %v673 = vsel %vm671, %v666, %v670
        %v674 = vsel %vm671, %v660, %v664
        %v675 = vsel %vm671, %v662, %v666
        %v676 = vsel %vm671, %v668, %v660
        %v677 = vsel %vm671, %v670, %v662
        %v678 = vmin.f32 %v653, %v674
        %v679 = vmin.f32 %v654, %v672
        %v680 = vmin.f32 %v655, %v676
        %v681 = vmin.f32 %v656, %v675
        %v682 = vmin.f32 %v657, %v673
        %v683 = vmin.f32 %v658, %v677
        %684 = vrot.lane.b32.xlu0 %v678, 19
        %v685 = vpop.permute.xlu0 %684
        %686 = vrot.lane.b32.xlu0 %v681, 19
        %v687 = vpop.permute.xlu0 %686
        %688 = vrot.lane.b32.xlu0 %v679, 19
        %v689 = vpop.permute.xlu0 %688
        %690 = vrot.lane.b32.xlu0 %v682, 19
        %v691 = vpop.permute.xlu0 %690
        %692 = vrot.lane.b32.xlu0 %v680, 19
        %v693 = vpop.permute.xlu0 %692
        %694 = vrot.lane.b32.xlu0 %v683, 19
        %v695 = vpop.permute.xlu0 %694
        %vm696 = vcmp.lt.s32.totalorder %v163, 19
        %v697 = vsel %vm696, %v689, %v693
        %v698 = vsel %vm696, %v691, %v695
        %v699 = vsel %vm696, %v685, %v689
        %v700 = vsel %vm696, %v687, %v691
        %v701 = vmin.f32 %v607, %v699
        %v702 = vmin.f32 %v605, %v697
        %v703 = vmin.f32 %v608, %v700
        %v704 = vmin.f32 %v606, %v698
        %705 = vrot.lane.b32.xlu0 %v678, 120
        %v706 = vpop.permute.xlu0 %705
        %707 = vrot.lane.b32.xlu0 %v681, 120
        %v708 = vpop.permute.xlu0 %707
        %709 = vrot.lane.b32.xlu0 %v679, 120
        %v710 = vpop.permute.xlu0 %709
        %711 = vrot.lane.b32.xlu0 %v682, 120
        %v712 = vpop.permute.xlu0 %711
        %713 = vrot.lane.b32.xlu0 %v680, 120
        %v714 = vpop.permute.xlu0 %713
        %715 = vrot.lane.b32.xlu0 %v683, 120
        %v716 = vpop.permute.xlu0 %715
        %vm717 = vcmp.lt.s32.totalorder %v163, 120
        %v718 = vsel %vm717, %v710, %v714
        %v719 = vsel %vm717, %v712, %v716
        %v720 = vsel %vm717, %v706, %v710
        %v721 = vsel %vm717, %v708, %v712
        %v722 = vsel %vm717, %v714, %v706
        %v723 = vsel %vm717, %v716, %v708
        %v724 = vmin.f32 %v678, %v720
        %v725 = vmin.f32 %v679, %v718
        %v726 = vmin.f32 %v680, %v722
        %v727 = vmin.f32 %v681, %v721
        %v728 = vmin.f32 %v682, %v719
        %v729 = vmin.f32 %v683, %v723
        %730 = vrot.lane.b32.xlu0 %v724, 112
        %v731 = vpop.permute.xlu0 %730
        %732 = vrot.lane.b32.xlu0 %v727, 112
        %v733 = vpop.permute.xlu0 %732
        %734 = vrot.lane.b32.xlu0 %v725, 112
        %v735 = vpop.permute.xlu0 %734
        %736 = vrot.lane.b32.xlu0 %v728, 112
        %v737 = vpop.permute.xlu0 %736
        %738 = vrot.lane.b32.xlu0 %v726, 112
        %v739 = vpop.permute.xlu0 %738
        %740 = vrot.lane.b32.xlu0 %v729, 112
        %v741 = vpop.permute.xlu0 %740
        %vm742 = vcmp.lt.s32.totalorder %v163, 112
        %v743 = vsel %vm742, %v735, %v739
        %v744 = vsel %vm742, %v737, %v741
        %v745 = vsel %vm742, %v731, %v735
        %v746 = vsel %vm742, %v733, %v737
        %v747 = vsel %vm742, %v739, %v731
        %v748 = vsel %vm742, %v741, %v733
        %v749 = vmin.f32 %v724, %v745
        %v750 = vmin.f32 %v725, %v743
        %v751 = vmin.f32 %v726, %v747
        %v752 = vmin.f32 %v727, %v746
        %v753 = vmin.f32 %v728, %v744
        %v754 = vmin.f32 %v729, %v748
        %755 = vrot.lane.b32.xlu0 %v749, 11
        %v756 = vpop.permute.xlu0 %755
        %757 = vrot.lane.b32.xlu0 %v752, 11
        %v758 = vpop.permute.xlu0 %757
        %759 = vrot.lane.b32.xlu0 %v750, 11
        %v760 = vpop.permute.xlu0 %759
        %761 = vrot.lane.b32.xlu0 %v753, 11
        %v762 = vpop.permute.xlu0 %761
        %763 = vrot.lane.b32.xlu0 %v751, 11
        %v764 = vpop.permute.xlu0 %763
        %765 = vrot.lane.b32.xlu0 %v754, 11
        %v766 = vpop.permute.xlu0 %765
        %vm767 = vcmp.lt.s32.totalorder %v163, 11
        %v768 = vsel %vm767, %v760, %v764
        %v769 = vsel %vm767, %v762, %v766
        %v770 = vsel %vm767, %v756, %v760
        %v771 = vsel %vm767, %v758, %v762
        %v772 = vmin.f32 %v701, %v770
        %v773 = vmin.f32 %v702, %v768
        %v774 = vmin.f32 %v703, %v771
        %v775 = vmin.f32 %v704, %v769
        %v776 = vand.u32 2147483647, %v772
        %v777 = vand.u32 2147483647, %v773
        %v778 = vand.u32 2147483647, %v774
        %v779 = vand.u32 2147483647, %v775
        %780 = vst [vmem:[%s84] sm:$0xff] %v776
        %781 = vst [vmem:[%s84 + $0x8] sm:$0xff] %v777
        %782 = vst [vmem:[%s84 + $0x10] sm:$0xff] %v778
        %783 = vst [vmem:[%s84 + $0x18] sm:$0xff] %v779
        %v784 = vsel %vm171, %v776, 0.0
        %v785 = vsel %vm172, %v777, 0.0
        %v786 = vsel %vm173, %v778, 0.0
        %v787 = vsel %vm174, %v779, 0.0
        %v788 = vadd.f32 %v784, %v785
        %789 = vadd.xlane.f32.xlu0 %v788
        %v790 = vpop.xlane.xlu0 %789
        %v791 = vadd.f32 %v786, %v787
        %792 = vadd.xlane.f32.xlu0 %v791
        %v793 = vpop.xlane.xlu0 %792
        %v794 = vadd.f32 %v790, %v793
        %v795 = vrot.slane %v794, 4
        %v796 = vadd.f32 %v794, %v795
        %v797 = vrot.slane %v796, 2
        %v798 = vadd.f32 %v796, %v797
        %v799 = vrot.slane %v798, 1
        %v800 = vadd.f32 %v798, %v799
        %v801 = vadd.f32 %v800, 0.0
        %802 = vst [vmem:[%s91] sm:$0xff] %v801
        %s803 = sand.u32 %s36, 1
        %s804 = scalar_lea.sflag [#allocation5], %s803
        %s805 = sand.u32 %s36, 1
        %s806 = smul.addr %s805, 32
        %s807 = scalar_lea.vmem [#allocation4], %s806
        %s808 = sand.u32 %s57, 1
        %s809 = scalar_lea.sflag [#allocation7], %s808
        %s810 = sand.u32 %s57, 1
        %s811 = smul.addr %s810, 8
        %s812 = scalar_lea.vmem [#allocation6], %s811
        // Predicated region
        $region21: #{tpu_custom_call.1} parent=11 // pred_check
          %p813 = pneg %p42
        $region22: #{tpu_custom_call.1} parent=11 // pred_check_branch
          %815 = sbr.rel (%p813) target = $region24
        $region23: #{tpu_custom_call.1} parent=11 // pred_region
          %s816 = smul.u32 2, %s22
          %s818 = ssub.s32 512, 512
          %819 = vsyncadd %s804, %s818
          %s820 = smul.addr %s816, 2
          %s821 = smul.addr %s21, 12
          %s822 = sadd.s32 %s820, %s821
          %s823 = smul.addr %s822, 128
          %s824 = scalar_lea.hbm %s1, %s823
          %s825 = sshll.u32 %s807, 4
          %s826 = int_to_ptr.vmem [resolvable:$true] %s825
          %831 = dma.vmem_to_hbm [thread:$0]  %s826, 512, %s824, %s804, 256, 256, 16
        $region24: #{tpu_custom_call.1} parent=11 // pred_fallthru
          _
        // Predicated region
        $region25: #{tpu_custom_call.1} parent=11 // pred_check
          %p832 = pneg %p63
        $region26: #{tpu_custom_call.1} parent=11 // pred_check_branch
          %834 = sbr.rel (%p832) target = $region28
        $region27: #{tpu_custom_call.1} parent=11 // pred_region
          %s836 = ssub.s32 128, 128
          %837 = vsyncadd %s809, %s836
          %s838 = smul.addr %s21, 3
          %s839 = sadd.s32 %s22, %s838
          %s840 = smul.addr %s839, 128
          %s841 = scalar_lea.hbm %s2, %s840
          %s843 = sshll.u32 %s812, 4
          %s844 = int_to_ptr.vmem [resolvable:$true] %s843
          %846 = dma.vmem_to_hbm [thread:$0]  %s844, 128, %s841, %s809
        $region28: #{tpu_custom_call.1} parent=11 // pred_fallthru
          _
      $region12: #{tpu_custom_call.1} parent=5 // pred_fallthru
        _
      %p847 = scmp.le.s32.totalorder 1, %s15
      // Predicated region
      $region29: #{tpu_custom_call.1} parent=5 // pred_check
        %p848 = pneg %p847
      $region30: #{tpu_custom_call.1} parent=5 // pred_check_branch
        %850 = sbr.rel (%p848) target = $region32
      $region31: #{tpu_custom_call.1} parent=5 // pred_region
        %s851 = ssub.s32 %s15, 1
        // Predicated region
        $region33: #{tpu_custom_call.1} parent=31 // pred_check
          %p852 = pneg %p48
        $region34: #{tpu_custom_call.1} parent=31 // pred_check_branch
          %854 = sbr.rel (%p852) target = $region36
        $region35: #{tpu_custom_call.1} parent=31 // pred_region
          %s855 = sand.u32 %s39, 1
          %s856 = scalar_lea.sflag [#allocation5], %s855
          %s857 = sand.u32 %s39, 1
          %s858 = smul.addr %s857, 32
          %s859 = scalar_lea.vmem [#allocation4], %s858
          %860 = dma.done %s856, 512
        $region36: #{tpu_custom_call.1} parent=31 // pred_fallthru
          _
        // Predicated region
        $region37: #{tpu_custom_call.1} parent=31 // pred_check
          %p861 = pneg %p69
        $region38: #{tpu_custom_call.1} parent=31 // pred_check_branch
          %863 = sbr.rel (%p861) target = $region40
        $region39: #{tpu_custom_call.1} parent=31 // pred_region
          %s864 = sand.u32 %s60, 1
          %s865 = scalar_lea.sflag [#allocation7], %s864
          %s866 = sand.u32 %s60, 1
          %s867 = smul.addr %s866, 8
          %s868 = scalar_lea.vmem [#allocation6], %s867
          %869 = dma.done %s865, 128
        $region40: #{tpu_custom_call.1} parent=31 // pred_fallthru
          _
      $region32: #{tpu_custom_call.1} parent=5 // pred_fallthru
        _
    $region6: #{tpu_custom_call.1} parent=1 // loop_footer
      %s19 = sadd.s32 1, %s15
    $region7: #{tpu_custom_call.1} parent=1 // loop_footer_branch
      %14 = sbr.rel target = $region3
    $region8: #{tpu_custom_call.1} parent=1 // loop_exit
      _
    %870 = vsyncpa [#allocation5], 1
    %s871 = scalar_lea.sflag [#allocation5], 1
    %872 = vsyncpa %s871, 1
    %873 = vsyncpa [#allocation7], 1
    %s874 = scalar_lea.sflag [#allocation7], 1
    %875 = vsyncpa %s874, 1
  %876 = vsyncmov [#allocation3]
  %s877 = vpop.sfrf %876
  %p878 = scmp.eq.s32.totalorder %s877, 0
  %p879 = pneg %p878
  %881 = shalt.err (%p879)
  %s882 = scalar_lea.sflag [#allocation3], 1
  %883 = vsyncmov %s882
  %s884 = vpop.sfrf %883
  %p885 = scmp.eq.s32.totalorder %s884, 0
  %p886 = pneg %p885
  %888 = shalt.err (%p886)

</llo_original>
